<compile_context>
chip_gen: v6e
topology: v6e:2x2x1
jax: 0.10.0
libtpu: 0.0.40
codegen_flags: <defaults>
</compile_context>

<pallas_src>
import functools

import jax
import jax.numpy as jnp
from jax import lax
from jax.experimental import pallas as pl
from jax.experimental.pallas import tpu as pltpu


def _custom_loss_partial_kernel(total_rows, block_rows, out_ref, lab_ref, part_ref):
    # out_ref : (TB, C) logits tile in VMEM
    # lab_ref : (TB, 1) int32 labels tile in VMEM
    # part_ref: (1, 2)  f32 per-tile partial sums in SMEM
    #           [0,0] -> sum over tile of the "term1" tensor
    #           [0,1] -> sum over tile of per-row NLL
    i = pl.program_id(0)
    x = out_ref[...].astype(jnp.float32)            # upcast in-kernel (bf16-friendly)
    labels = lab_ref[...]                           # (TB, 1) int32
    tb, c = x.shape

    # Mask rows of a ragged last tile (padding beyond the real batch).
    row = lax.broadcasted_iota(jnp.int32, (tb, 1), 0) + i * block_rows
    valid = row < total_rows                        # (TB, 1) bool

    col = lax.broadcasted_iota(jnp.int32, (tb, c), 1)
    onehot = col == labels                          # (TB, C) bool, one True per row

    # ----- term1: flip sign at the label position, shift/zero, sum -----
    t = jnp.where(onehot, -x, x)
    t = jnp.where(t > -1.0, t + 2.0, jnp.zeros_like(t))
    t = jnp.where(valid, t, jnp.zeros_like(t))      # zero out padded rows
    part_ref[0, 0] = jnp.sum(t)

    # ----- term2: CrossEntropy(LogSoftmax(x), labels) -----
    # log_softmax(log_softmax(x)) == log_softmax(x), so per-row NLL is
    # logsumexp(x_i) - x[i, label_i].
    m = jnp.max(x, axis=1, keepdims=True)                               # (TB, 1)
    lse = m + jnp.log(jnp.sum(jnp.exp(x - m), axis=1, keepdims=True))   # (TB, 1)
    gathered = jnp.sum(jnp.where(onehot, x, jnp.zeros_like(x)),
                       axis=1, keepdims=True)                           # (TB, 1)
    nll = jnp.where(valid, lse - gathered, jnp.zeros_like(lse))
    part_ref[0, 1] = jnp.sum(nll)


def custom_loss(output, labels, p=0.3, block_rows=512):
    """output: (B, C) float logits; labels: (B,) int -> scalar loss (f32)."""
    B, C = output.shape
    labels2 = labels.reshape(B, 1).astype(jnp.int32)

    if B <= block_rows:
        tb = B                   # single tile == full batch dim (always legal)
    else:
        tb = block_rows
        assert tb % 8 == 0, "block_rows must be a multiple of 8"
    nb = pl.cdiv(B, tb)

    # TODO(synk): for vocab-scale C (>> few K) also tile the class dim with an
    # online logsumexp; not needed at these shapes.
    kernel = functools.partial(_custom_loss_partial_kernel, B, tb)
    partials = pl.pallas_call(
        kernel,
        out_shape=jax.ShapeDtypeStruct((nb, 2), jnp.float32),
        grid=(nb,),
        in_specs=[
            pl.BlockSpec((tb, C), lambda i: (i, 0)),
            pl.BlockSpec((tb, 1), lambda i: (i, 0)),
        ],
        out_specs=pl.BlockSpec((1, 2), lambda i: (i, 0),
                               memory_space=pltpu.MemorySpace.SMEM),
        compiler_params=pltpu.CompilerParams(
            dimension_semantics=("parallel",)),
    )(output, labels2)

    p = float(p)
    sum_t = jnp.sum(partials[:, 0])
    sum_nll = jnp.sum(partials[:, 1])
    # Folded scale factors, applied once at the end.
    return (p / float(B * C)) * sum_t + ((1.0 - p) / float(B)) * sum_nll


def custom_loss_ref(output, labels, p=0.3):
    """Pure-JAX reference mirroring the PyTorch module (incl. double log-softmax)."""
    B, C = output.shape
    onehot = jax.nn.one_hot(labels, C, dtype=bool)
    t = jnp.where(onehot, -output, output)
    t = jnp.where(t > -1.0, t + 2.0, jnp.zeros_like(t))
    term1 = jnp.mean(t)
    ls2 = jax.nn.log_softmax(jax.nn.log_softmax(output, axis=1), axis=1)
    nll = -jnp.mean(jnp.sum(jnp.where(onehot, ls2, 0.0), axis=1))
    return p * term1 + (1 - p) * nll


if __name__ == "__main__":
    key = jax.random.PRNGKey(0)
    k1, k2 = jax.random.split(key)

    # Case 1: small batch, single tile.
    B, C = 16, 128
    output = jax.random.normal(k1, (B, C), dtype=jnp.float32)
    labels = jax.random.randint(k2, (B,), 0, C, dtype=jnp.int32)
    loss = jax.block_until_ready(custom_loss(output, labels, p=0.3))
    ref = jax.block_until_ready(custom_loss_ref(output, labels, p=0.3))
    assert jnp.allclose(loss, ref, atol=1e-5, rtol=1e-5), (loss, ref)

    # Case 2: multi-tile grid with a ragged last tile (exercises pad masking).
    B2 = 20
    out2 = jax.random.normal(k1, (B2, C), dtype=jnp.float32)
    lab2 = jax.random.randint(k2, (B2,), 0, C, dtype=jnp.int32)
    loss2 = jax.block_until_ready(custom_loss(out2, lab2, p=0.3, block_rows=8))
    ref2 = jax.block_until_ready(custom_loss_ref(out2, lab2, p=0.3))
    assert jnp.allclose(loss2, ref2, atol=1e-5, rtol=1e-5), (loss2, ref2)

    print("KERNEL_OK")
</pallas_src>

<mosaic_0001>
module attributes {stable_mosaic.version = 11 : i64} {
  func.func @_custom_loss_partial_kernel(%arg0: i32, %arg1: memref<16x128xf32, #tpu.memory_space<vmem>>, %arg2: memref<16x1xi32, #tpu.memory_space<vmem>>, %arg3: memref<1x2xf32, #tpu.memory_space<smem>>) attributes {dimension_semantics = [#tpu.dimension_semantics<parallel>], iteration_bounds = array<i64: 1>, scalar_prefetch = 0 : i64, scratch_operands = 0 : i64, tpu.core_type = #tpu.core_type<tc>, window_params = [{transform_indices = @transform_0, window_bounds = array<i64: 16, 128>}, {transform_indices = @transform_1, window_bounds = array<i64: 16, 1>}, {transform_indices = @transform_2, window_bounds = array<i64: 1, 2>}]} {
    %c0 = arith.constant 0 : index
    %c0_0 = arith.constant 0 : index
    %0 = vector.load %arg1[%c0, %c0_0] : memref<16x128xf32, #tpu.memory_space<vmem>>, vector<16x128xf32>
    %c0_1 = arith.constant 0 : index
    %c0_2 = arith.constant 0 : index
    %1 = vector.load %arg2[%c0_1, %c0_2] : memref<16x1xi32, #tpu.memory_space<vmem>>, vector<16x1xi32>
    %2 = tpu.iota {dimensions = array<i32: 0>} : vector<16x1xi32>
    %c16_i32 = arith.constant 16 : i32
    %3 = arith.muli %arg0, %c16_i32 : i32
    %4 = vector.broadcast %3 : i32 to vector<16x1xi32>
    %5 = arith.addi %2, %4 : vector<16x1xi32>
    %c16_i32_3 = arith.constant 16 : i32
    %6 = vector.broadcast %c16_i32_3 : i32 to vector<16x1xi32>
    %7 = arith.cmpi slt, %5, %6 : vector<16x1xi32>
    %8 = tpu.iota {dimensions = array<i32: 1>} : vector<16x128xi32>
    %9 = vector.broadcast %1 : vector<16x1xi32> to vector<16x128xi32>
    %10 = arith.cmpi eq, %8, %9 : vector<16x128xi32>
    %cst = arith.constant 0.000000e+00 : f32
    %11 = vector.broadcast %cst : f32 to vector<16x128xf32>
    %12 = arith.subf %11, %0 : vector<16x128xf32>
    %13 = arith.select %10, %12, %0 : vector<16x128xi1>, vector<16x128xf32>
    %cst_4 = arith.constant -1.000000e+00 : f32
    %14 = vector.broadcast %cst_4 : f32 to vector<16x128xf32>
    %15 = arith.cmpf ogt, %13, %14 : vector<16x128xf32>
    %cst_5 = arith.constant 2.000000e+00 : f32
    %16 = vector.broadcast %cst_5 : f32 to vector<16x128xf32>
    %17 = arith.addf %13, %16 : vector<16x128xf32>
    %cst_6 = arith.constant 0.000000e+00 : f32
    %18 = vector.broadcast %cst_6 : f32 to vector<16x128xf32>
    %19 = arith.select %15, %17, %18 : vector<16x128xi1>, vector<16x128xf32>
    %cst_7 = arith.constant 0.000000e+00 : f32
    %20 = vector.broadcast %cst_7 : f32 to vector<16x128xf32>
    %21 = vector.shape_cast %7 : vector<16x1xi1> to vector<16x1xi1>
    %22 = vector.broadcast %21 : vector<16x1xi1> to vector<16x128xi1>
    %23 = arith.select %22, %19, %20 : vector<16x128xi1>, vector<16x128xf32>
    %24 = vector.shape_cast %23 : vector<16x128xf32> to vector<1x16x128xf32>
    %cst_8 = arith.constant dense<0.000000e+00> : vector<1xf32>
    %25 = vector.multi_reduction <add>, %24, %cst_8 [1, 2] : vector<1x16x128xf32> to vector<1xf32>
    %26 = vector.shape_cast %25 : vector<1xf32> to vector<1x1x1xf32>
    %27 = vector.extract %26[0, 0, 0] : f32 from vector<1x1x1xf32>
    %c0_9 = arith.constant 0 : index
    %c0_10 = arith.constant 0 : index
    %28 = memref.load %arg3[%c0_9, %c0_10] : memref<1x2xf32, #tpu.memory_space<smem>>
    memref.store %27, %arg3[%c0_9, %c0_10] : memref<1x2xf32, #tpu.memory_space<smem>>
    %cst_11 = arith.constant dense<0xFF800000> : vector<16xf32>
    %29 = vector.multi_reduction <maximumf>, %0, %cst_11 [1] : vector<16x128xf32> to vector<16xf32>
    %30 = vector.shape_cast %29 : vector<16xf32> to vector<16x1xf32>
    %31 = vector.broadcast %30 : vector<16x1xf32> to vector<16x128xf32>
    %32 = arith.subf %0, %31 : vector<16x128xf32>
    %33 = math.exp %32 : vector<16x128xf32>
    %cst_12 = arith.constant dense<0.000000e+00> : vector<16xf32>
    %34 = vector.multi_reduction <add>, %33, %cst_12 [1] : vector<16x128xf32> to vector<16xf32>
    %35 = vector.shape_cast %34 : vector<16xf32> to vector<16x1xf32>
    %36 = math.log %35 : vector<16x1xf32>
    %37 = arith.addf %30, %36 : vector<16x1xf32>
    %cst_13 = arith.constant 0.000000e+00 : f32
    %38 = vector.broadcast %cst_13 : f32 to vector<16x128xf32>
    %39 = arith.select %10, %0, %38 : vector<16x128xi1>, vector<16x128xf32>
    %cst_14 = arith.constant dense<0.000000e+00> : vector<16xf32>
    %40 = vector.multi_reduction <add>, %39, %cst_14 [1] : vector<16x128xf32> to vector<16xf32>
    %41 = vector.shape_cast %40 : vector<16xf32> to vector<16x1xf32>
    %42 = arith.subf %37, %41 : vector<16x1xf32>
    %cst_15 = arith.constant 0.000000e+00 : f32
    %43 = vector.broadcast %cst_15 : f32 to vector<16x1xf32>
    %44 = arith.select %7, %42, %43 : vector<16x1xi1>, vector<16x1xf32>
    %45 = vector.shape_cast %44 : vector<16x1xf32> to vector<1x16x1xf32>
    %cst_16 = arith.constant dense<0.000000e+00> : vector<1xf32>
    %46 = vector.multi_reduction <add>, %45, %cst_16 [1, 2] : vector<1x16x1xf32> to vector<1xf32>
    %47 = vector.shape_cast %46 : vector<1xf32> to vector<1x1x1xf32>
    %48 = vector.extract %47[0, 0, 0] : f32 from vector<1x1x1xf32>
    %c0_17 = arith.constant 0 : index
    %c1 = arith.constant 1 : index
    %49 = memref.load %arg3[%c0_17, %c1] : memref<1x2xf32, #tpu.memory_space<smem>>
    memref.store %48, %arg3[%c0_17, %c1] : memref<1x2xf32, #tpu.memory_space<smem>>
    return
  }
  func.func @transform_0(%arg0: i32) -> (i32, i32) {
    %c0_i32 = arith.constant 0 : i32
    %c0_i32_0 = arith.constant 0 : i32
    return %arg0, %c0_i32 : i32, i32
  }
  func.func @transform_1(%arg0: i32) -> (i32, i32) {
    %c0_i32 = arith.constant 0 : i32
    %c0_i32_0 = arith.constant 0 : i32
    return %arg0, %c0_i32 : i32, i32
  }
  func.func @transform_2(%arg0: i32) -> (i32, i32) {
    %c0_i32 = arith.constant 0 : i32
    %c0_i32_0 = arith.constant 0 : i32
    return %arg0, %c0_i32 : i32, i32
  }
}

</mosaic_0001>

<llo_original>
// kernel: tpu_custom_call.1
$region0: #{tpu_custom_call.1}
  #allocation0 [shape = 'u32[]', space=smem, size = 0x4, offset = 0x4, fixed_abs, tag = 'smem constant byte address 0x4 - core index']
  #allocation1 [shape = 'u32[144,128]{1,0:T(1,128)}', space=vmem, size = 0x12000, scoped, tag = 'internal scratch']
  %s0 = inlined_call_operand.vmem [shape: f32[16,128], index: 0, kind: input, shape index: {}]
  %s1 = inlined_call_operand.vmem [shape: s32[16,1], index: 1, kind: input, shape index: {}]
  %s2 = inlined_call_operand.hbm [shape: f32[1,2], index: 2, kind: output, shape index: {}]
  %s3 = sld [smem:[#allocation0]]
  $region18: #{tpu_custom_call.1} parent=0
    _
  %s5 = ssub.s32 1, %s3
  %s6 = scalar_select 0, %s5, %s3
  $region1: #{tpu_custom_call.1} parent=0
    #allocation2 [shape = 'u8[512]{0}', space=smem, size = 0x200, scoped, tag = 'output window, operand 0, single buffered']
    #allocation3 [shape = 's32[1]{0}', space=sflag, size = 0x4, scoped, tag = 'scoped memory for tpu_custom_call.1']
    %7 = vsyncpa [#allocation3], 0
    // Predicated region
    $region2: #{tpu_custom_call.1} parent=1 // pred_check
      _
    $region3: #{tpu_custom_call.1} parent=1 // pred_check_branch
      %9 = sbr.rel (0) target = $region5
    $region4: #{tpu_custom_call.1} parent=1 // pred_region
      _
    $region5: #{tpu_custom_call.1} parent=1 // pred_fallthru
      _
    // Predicated region
    $region6: #{tpu_custom_call.1} parent=1 // pred_check
      _
    $region7: #{tpu_custom_call.1} parent=1 // pred_check_branch
      %11 = sbr.rel (0) target = $region9
    $region8: #{tpu_custom_call.1} parent=1 // pred_region
      _
    $region9: #{tpu_custom_call.1} parent=1 // pred_fallthru
      _
    %v12 = vld [vmem:[%s0] sm:$0xff]
    %v13 = vld [vmem:[%s0 + $0x8] sm:$0xff]
    %v14 = vld [vmem:[%s1] sm:$0xff]
    %v15 = vld [vmem:[%s1 + $0x8] sm:$0xff]
    %v16 = vlaneseq
    %v17 = vshrl.u32 %v16, 7
    %v18 = vadd.s32 %v17, 8
    %s19 = smul.u32 0, 16
    %v20 = vstv %s19
    %v21 = vadd.s32 %v17, %v20
    %v22 = vadd.s32 %v18, %v20
    %vm23 = vcmp.lt.s32.totalorder %v21, 16
    %vm24 = vcmp.lt.s32.totalorder %v22, 16
    %v25 = vlaneseq
    %v26 = vand.u32 %v25, 127
    %27 = vset.pattern.permute.xlu0 0
    %28 = vperm.xlu0 %27, %v14
    %v29 = vpop.permute.xlu0 %28
    %30 = vset.pattern.permute.xlu0 0
    %31 = vperm.xlu0 %30, %v15
    %v32 = vpop.permute.xlu0 %31
    %vm33 = vcmp.eq.s32.totalorder %v26, %v29
    %vm34 = vcmp.eq.s32.totalorder %v26, %v32
    %v35 = vsub.f32 0.0, %v12
    %v36 = vsub.f32 0.0, %v13
    %v37 = vsel %vm33, %v35, %v12
    %v38 = vsel %vm34, %v36, %v13
    %vm39 = vcmp.gt.f32.partialorder %v37, -1.0
    %vm40 = vcmp.gt.f32.partialorder %v38, -1.0
    %v41 = vadd.f32 %v37, 2.0
    %v42 = vadd.f32 %v38, 2.0
    %v43 = vsel %vm39, %v41, 0.0
    %v44 = vsel %vm40, %v42, 0.0
    %v45 = vsel %vm23, 1, 0
    %v46 = vsel %vm24, 1, 0
    %vm47 = vcmp.eq.s32.totalorder %v45, 1
    %vm48 = vcmp.eq.s32.totalorder %v46, 1
    %v49 = vsel %vm47, %v43, 0.0
    %v50 = vsel %vm48, %v44, 0.0
    %v51 = vadd.f32 %v49, %v50
    %52 = vadd.xlane.f32.xlu0 %v51
    %v53 = vpop.xlane.xlu0 %52
    %v54 = vrot.slane %v53, 4
    %v55 = vadd.f32 %v53, %v54
    %v56 = vrot.slane %v55, 2
    %v57 = vadd.f32 %v55, %v56
    %v58 = vrot.slane %v57, 1
    %v59 = vadd.f32 %v57, %v58
    %s60 = vtos %v59
    %s61 = scalar_lea.smem [#allocation2], 0
    %62 = sst [smem:[%s61]] %s60
    %63 = vmax.xlane.f32.xlu0 %v12
    %v64 = vpop.xlane.xlu0 %63
    %65 = vmax.xlane.f32.xlu0 %v13
    %v66 = vpop.xlane.xlu0 %65
    %v67 = vsub.f32 %v12, %v64
    %v68 = vsub.f32 %v13, %v66
    %v69 = vmul.f32 %v67, 1.442695
    %v70 = vpow.pop %v69
    %v71 = vmul.f32 %v68, 1.442695
    %v72 = vpow.pop %v71
    %73 = vadd.xlane.f32.xlu0 %v70
    %v74 = vpop.xlane.xlu0 %73
    %75 = vadd.xlane.f32.xlu0 %v72
    %v76 = vpop.xlane.xlu0 %75
    %v77 = vlog2.pop %v74
    %v78 = vmul.f32 %v77, 0.6931472
    %v79 = vlog2.pop %v76
    %v80 = vmul.f32 %v79, 0.6931472
    %v81 = vadd.f32 %v64, %v78
    %v82 = vadd.f32 %v66, %v80
    %v83 = vsel %vm33, %v12, 0.0
    %v84 = vsel %vm34, %v13, 0.0
    %85 = vadd.xlane.f32.xlu0 %v83
    %v86 = vpop.xlane.xlu0 %85
    %87 = vadd.xlane.f32.xlu0 %v84
    %v88 = vpop.xlane.xlu0 %87
    %v89 = vsub.f32 %v81, %v86
    %v90 = vsub.f32 %v82, %v88
    %v91 = vsel %vm23, %v89, 0.0
    %v92 = vsel %vm24, %v90, 0.0
    %vm93 = vcmask 7168
    %v94 = vsel %vm93, %v91, 0.0
    %v95 = vsel %vm93, %v92, 0.0
    %v96 = vadd.f32 %v94, %v95
    %97 = vadd.xlane.f32.xlu0 %v96
    %v98 = vpop.xlane.xlu0 %97
    %v99 = vrot.slane %v98, 4
    %v100 = vadd.f32 %v98, %v99
    %v101 = vrot.slane %v100, 2
    %v102 = vadd.f32 %v100, %v101
    %v103 = vrot.slane %v102, 1
    %v104 = vadd.f32 %v102, %v103
    %s105 = vtos %v104
    %s106 = scalar_lea.smem [#allocation2], 1
    %107 = sst [smem:[%s106]] %s105
    // Predicated region
    $region10: #{tpu_custom_call.1} parent=1 // pred_check
      _
    $region11: #{tpu_custom_call.1} parent=1 // pred_check_branch
      %109 = sbr.rel (0) target = $region13
    $region12: #{tpu_custom_call.1} parent=1 // pred_region
      %s111 = ssub.s32 16, 16
      %112 = vsyncadd [#allocation3], %s111
      %115 = dma.smem_to_hbm [#allocation2], 16, %s2, [#allocation3]
    $region13: #{tpu_custom_call.1} parent=1 // pred_fallthru
      _
    // Predicated region
    $region14: #{tpu_custom_call.1} parent=1 // pred_check
      _
    $region15: #{tpu_custom_call.1} parent=1 // pred_check_branch
      %117 = sbr.rel (0) target = $region17
    $region16: #{tpu_custom_call.1} parent=1 // pred_region
      %118 = dma.done [#allocation3], 16
    $region17: #{tpu_custom_call.1} parent=1 // pred_fallthru
      _
    %119 = sfence
    %120 = vsyncpa [#allocation3], 1

</llo_original>
